<compile_context>
chip_gen: v6e
topology: v6e:2x2x1
jax: 0.10.0
libtpu: 0.0.40
codegen_flags: <defaults>
</compile_context>

<pallas_src>
import functools

import jax
import jax.numpy as jnp
from jax.experimental import pallas as pl
from jax.experimental.pallas import tpu as pltpu


def _mape_kernel(f_ref, t_ref, m_ref, o_ref, *,
                 n_rows, n_cols, tm, tn, acc_rows, mask_rows, mask_cols):
    i = pl.program_id(0)
    j = pl.program_id(1)

    # j is the innermost ("arbitrary") reduction axis: the output block for
    # row-block i stays resident in VMEM across it -> accumulate straight into it.
    @pl.when(j == 0)
    def _():
        o_ref[...] = jnp.zeros_like(o_ref)

    f = f_ref[...].astype(jnp.float32)
    t = t_ref[...].astype(jnp.float32)
    m = m_ref[...].astype(jnp.float32)

    # divide_no_nan: a/b with NaN *and* +/-Inf results replaced by 0.
    # abs(w) < inf  <=>  isfinite(w) (NaN compares false): one abs + one cmp.
    w = m / t
    w = jnp.where(jnp.abs(w) < jnp.float32(jnp.inf), w, jnp.float32(0.0))
    err = jnp.abs(f - t) * w

    # Ragged edges handled in-kernel (no wrapper-side pad copies): zero the
    # out-of-bounds cells of partial edge blocks.  Only emitted when needed.
    if mask_rows or mask_cols:
        valid = None
        if mask_rows:
            rows = jax.lax.broadcasted_iota(jnp.int32, (tm, tn), 0) + i * tm
            valid = rows < n_rows
        if mask_cols:
            cols = jax.lax.broadcasted_iota(jnp.int32, (tm, tn), 1) + j * tn
            cval = cols < n_cols
            valid = cval if valid is None else (valid & cval)
        err = jnp.where(valid, err, jnp.float32(0.0))

    # Reduce only down to `acc_rows` sublanes: static sublane-aligned slices +
    # vreg-wise VALU adds (no cross-sublane XLU reduce per step).  The final
    # tiny reduce is folded into the wrapper's jnp.sum.
    partial = err[0:acc_rows, :]
    for s in range(1, tm // acc_rows):
        partial = partial + err[s * acc_rows:(s + 1) * acc_rows, :]
    o_ref[...] += partial[None]


def _block_dim(n, align, cap):
    """Largest legal block extent: `cap` (aligned) when n >= cap, the full dim when
    it cannot be aligned (always legal), else the largest aligned size <= n."""
    if n >= cap:
        return cap
    if n <= align:
        return n
    return (n // align) * align


def _vmem_budget():
    """Generation-aware (column cap, vmem_limit_bytes)."""
    cap = 64 * 1024 * 1024                 # conservative default (v7x-sized VMEM)
    try:
        cap = getattr(pltpu.get_tpu_info(), "vmem_capacity_bytes", cap)
    except Exception:
        pass
    if cap >= 100 * 1024 * 1024:           # v5e / v6e: 128 MiB physical VMEM
        return 4096, 48 * 1024 * 1024      # 3 in x 2 buf x 4 MiB = 24 MiB live
    return 2048, 40 * 1024 * 1024          # v7x: 64 MiB per TC -> 12 MiB live


def _lane_dense_width(n_elems, col_cap):
    """Largest L <= col_cap with L % 128 == 0 and L dividing n_elems (0 if none)."""
    if n_elems % 128 != 0:
        return 0
    m = n_elems // 128
    for d in range(min(col_cap // 128, m), 0, -1):
        if m % d == 0:
            return 128 * d
    return 0


def mape_loss(forecast, target, mask, *, row_cap=256):
    assert forecast.shape == target.shape == mask.shape
    assert forecast.ndim == 2
    B, T = forecast.shape
    count = B * T

    col_cap, vmem_limit = _vmem_budget()
    # Sub-32-bit inputs (e.g. bf16 forecast/target or int8/bool mask) pack along
    # sublanes -> stricter second-minor alignment; kernel casts to f32 in VMEM.
    row_align = max(8, *(32 // a.dtype.itemsize for a in (forecast, target, mask)))

    # Lane density: the elementwise+sum math is layout agnostic, so when the
    # flattened element count admits a wider lane-dense 2-D view, use it (a
    # contiguous row-major reshape is free).  Otherwise keep (B, T) + masking.
    tn_bt = _block_dim(T, 128, col_cap)
    lane_w = _lane_dense_width(count, col_cap)
    if lane_w > tn_bt:
        R, C = count // lane_w, lane_w
        arrays = [a.reshape(R, C) for a in (forecast, target, mask)]
    else:
        R, C = B, T
        arrays = [forecast, target, mask]

    tm = _block_dim(R, row_align, row_cap)
    tn = _block_dim(C, 128, col_cap)

    # v7x megacore: ensure the "parallel" row axis has >= 2 blocks when the row
    # count allows it, so both TensorCores get work (no-op on single-TC chips).
    if pl.cdiv(R, tm) < 2 and R >= 2 * row_align:
        tm = max(row_align, ((R // 2) // row_align) * row_align)

    nbi = pl.cdiv(R, tm)
    nbj = pl.cdiv(C, tn)
    # 8-sublane accumulator when the row block allows it (full unmasked vreg
    # stores); fall back to a single accumulator row for tiny row blocks.
    acc_rows = 8 if tm % 8 == 0 else 1

    kernel = functools.partial(
        _mape_kernel,
        n_rows=R, n_cols=C, tm=tm, tn=tn, acc_rows=acc_rows,
        mask_rows=(R % tm != 0), mask_cols=(C % tn != 0))

    in_bytes = sum(a.size * a.dtype.itemsize for a in arrays)
    out_bytes = nbi * acc_rows * tn * 4

    partials = pl.pallas_call(
        kernel,
        out_shape=jax.ShapeDtypeStruct((nbi, acc_rows, tn), jnp.float32),
        grid_spec=pltpu.PrefetchScalarGridSpec(
            num_scalar_prefetch=0,
            grid=(nbi, nbj),
            in_specs=[
                pl.BlockSpec((tm, tn), lambda i, j: (i, j)),
                pl.BlockSpec((tm, tn), lambda i, j: (i, j)),
                pl.BlockSpec((tm, tn), lambda i, j: (i, j)),
            ],
            out_specs=pl.BlockSpec((1, acc_rows, tn), lambda i, j: (i, 0, 0)),
        ),
        compiler_params=pltpu.CompilerParams(
            dimension_semantics=("parallel", "arbitrary"),
            vmem_limit_bytes=vmem_limit,
        ),
        cost_estimate=pl.CostEstimate(
            flops=6 * count, transcendentals=0,
            bytes_accessed=in_bytes + out_bytes),
    )(*arrays)

    # Tiny final reduce + mean scale over the ORIGINAL element count.
    return jnp.sum(partials) * (1.0 / count)


def _mape_ref(forecast, target, mask):
    w = mask / target
    w = jnp.where(jnp.isnan(w) | jnp.isinf(w), 0.0, w)
    return jnp.mean(jnp.abs(forecast - target) * w)


if __name__ == "__main__":
    key = jax.random.PRNGKey(0)

    def make_case(k, batch, time):
        k1, k2, k3 = jax.random.split(k, 3)
        forecast = jax.random.normal(k1, (batch, time), dtype=jnp.float32)
        target = jax.random.normal(k2, (batch, time), dtype=jnp.float32)
        # binary mask, plus forced zeros in target to exercise divide_no_nan
        mask = (jax.random.uniform(k3, (batch, time)) > 0.3).astype(jnp.float32)
        target = target.at[0, :5].set(0.0)
        return forecast, target, mask

    cases = [
        (4, 96),    # lane-dense flatten path: (4*96) -> (1, 384)
        (20, 200),  # fallback (B, T) path with ragged row+col edge blocks
        (16, 256),  # flatten path, multiple of 128, generation-dependent split
    ]
    keys = jax.random.split(key, len(cases))
    for k, (b, t_) in zip(keys, cases):
        f, tg, m = make_case(k, b, t_)
        out = mape_loss(f, tg, m)
        jax.block_until_ready(out)
        ref = _mape_ref(f, tg, m)
        assert jnp.allclose(out, ref, rtol=1e-5, atol=1e-6), (b, t_, out, ref)

    print("KERNEL_OK")
</pallas_src>

<mosaic_0001>
module attributes {stable_mosaic.version = 11 : i64} {
  func.func @_mape_kernel(%arg0: i32, %arg1: i32, %arg2: memref<1x384xf32, #tpu.memory_space<vmem>>, %arg3: memref<1x384xf32, #tpu.memory_space<vmem>>, %arg4: memref<1x384xf32, #tpu.memory_space<vmem>>, %arg5: memref<1x1x384xf32, #tpu.memory_space<vmem>>) attributes {dimension_semantics = [#tpu.dimension_semantics<parallel>, #tpu.dimension_semantics<arbitrary>], iteration_bounds = array<i64: 1, 1>, scalar_prefetch = 0 : i64, scratch_operands = 0 : i64, tpu.core_type = #tpu.core_type<tc>, window_params = [{transform_indices = @transform_0, window_bounds = array<i64: 1, 384>}, {transform_indices = @transform_1, window_bounds = array<i64: 1, 384>}, {transform_indices = @transform_2, window_bounds = array<i64: 1, 384>}, {transform_indices = @transform_3, window_bounds = array<i64: 1, 1, 384>}]} {
    %c0_i32 = arith.constant 0 : i32
    %0 = arith.cmpi eq, %arg1, %c0_i32 : i32
    %1 = arith.extui %0 : i1 to i32
    %c0_i32_0 = arith.constant 0 : i32
    %2 = arith.cmpi ne, %1, %c0_i32_0 : i32
    scf.if %2 {
      %cst_13 = arith.constant 0.000000e+00 : f32
      %19 = vector.broadcast %cst_13 : f32 to vector<1x1x384xf32>
      %c0_14 = arith.constant 0 : index
      %c0_15 = arith.constant 0 : index
      %c0_16 = arith.constant 0 : index
      %20 = vector.load %arg5[%c0_14, %c0_15, %c0_16] : memref<1x1x384xf32, #tpu.memory_space<vmem>>, vector<1x1x384xf32>
      tpu.vector_store %arg5[%c0_14, %c0_15, %c0_16], %19 {strides = array<i32>} : memref<1x1x384xf32, #tpu.memory_space<vmem>>, vector<1x1x384xf32>,
    } else {
    }
    %c0 = arith.constant 0 : index
    %c0_1 = arith.constant 0 : index
    %3 = vector.load %arg2[%c0, %c0_1] : memref<1x384xf32, #tpu.memory_space<vmem>>, vector<1x384xf32>
    %c0_2 = arith.constant 0 : index
    %c0_3 = arith.constant 0 : index
    %4 = vector.load %arg3[%c0_2, %c0_3] : memref<1x384xf32, #tpu.memory_space<vmem>>, vector<1x384xf32>
    %c0_4 = arith.constant 0 : index
    %c0_5 = arith.constant 0 : index
    %5 = vector.load %arg4[%c0_4, %c0_5] : memref<1x384xf32, #tpu.memory_space<vmem>>, vector<1x384xf32>
    %6 = arith.divf %5, %4 : vector<1x384xf32>
    %7 = math.absf %6 : vector<1x384xf32>
    %cst = arith.constant 0x7F800000 : f32
    %8 = vector.broadcast %cst : f32 to vector<1x384xf32>
    %9 = arith.cmpf olt, %7, %8 : vector<1x384xf32>
    %cst_6 = arith.constant 0.000000e+00 : f32
    %10 = vector.broadcast %cst_6 : f32 to vector<1x384xf32>
    %11 = arith.select %9, %6, %10 : vector<1x384xi1>, vector<1x384xf32>
    %12 = arith.subf %3, %4 : vector<1x384xf32>
    %13 = math.absf %12 : vector<1x384xf32>
    %14 = arith.mulf %13, %11 : vector<1x384xf32>
    %c0_7 = arith.constant 0 : index
    %c0_8 = arith.constant 0 : index
    %c0_9 = arith.constant 0 : index
    %15 = vector.load %arg5[%c0_7, %c0_8, %c0_9] : memref<1x1x384xf32, #tpu.memory_space<vmem>>, vector<1x1x384xf32>
    %16 = vector.shape_cast %14 : vector<1x384xf32> to vector<1x1x384xf32>
    %17 = arith.addf %15, %16 : vector<1x1x384xf32>
    %c0_10 = arith.constant 0 : index
    %c0_11 = arith.constant 0 : index
    %c0_12 = arith.constant 0 : index
    %18 = vector.load %arg5[%c0_10, %c0_11, %c0_12] : memref<1x1x384xf32, #tpu.memory_space<vmem>>, vector<1x1x384xf32>
    tpu.vector_store %arg5[%c0_10, %c0_11, %c0_12], %17 {strides = array<i32>} : memref<1x1x384xf32, #tpu.memory_space<vmem>>, vector<1x1x384xf32>,
    return
  }
  func.func @transform_0(%arg0: i32, %arg1: i32) -> (i32, i32) {
    %c0_i32 = arith.constant 0 : i32
    return %arg0, %arg1 : i32, i32
  }
  func.func @transform_1(%arg0: i32, %arg1: i32) -> (i32, i32) {
    %c0_i32 = arith.constant 0 : i32
    return %arg0, %arg1 : i32, i32
  }
  func.func @transform_2(%arg0: i32, %arg1: i32) -> (i32, i32) {
    %c0_i32 = arith.constant 0 : i32
    return %arg0, %arg1 : i32, i32
  }
  func.func @transform_3(%arg0: i32, %arg1: i32) -> (i32, i32, i32) {
    %c0_i32 = arith.constant 0 : i32
    %c0_i32_0 = arith.constant 0 : i32
    %c0_i32_1 = arith.constant 0 : i32
    return %arg0, %c0_i32, %c0_i32_0 : i32, i32, i32
  }
}

</mosaic_0001>

<llo_original>
// kernel: tpu_custom_call.1
$region0: #{tpu_custom_call.1}
  #allocation0 [shape = 'u32[]', space=smem, size = 0x4, offset = 0x4, fixed_abs, tag = 'smem constant byte address 0x4 - core index']
  #allocation1 [shape = 'u32[144,128]{1,0:T(1,128)}', space=vmem, size = 0x12000, scoped, tag = 'internal scratch']
  %s0 = inlined_call_operand.hbm [shape: f32[1,384], index: 0, kind: input, shape index: {}]
  %s1 = inlined_call_operand.hbm [shape: f32[1,384], index: 1, kind: input, shape index: {}]
  %s2 = inlined_call_operand.vmem [shape: f32[1,384], index: 2, kind: input, shape index: {}]
  %s3 = inlined_call_operand.hbm [shape: f32[1,1,384], index: 3, kind: output, shape index: {}]
  %s4 = sld [smem:[#allocation0]]
  $region34: #{tpu_custom_call.1} parent=0
    _
  %s6 = ssub.s32 1, %s4
  %s7 = scalar_select 0, %s6, %s4
  $region1: #{tpu_custom_call.1} parent=0
    #allocation2 [shape = 'u8[1536]{0}', space=vmem, size = 0x800, scoped, tag = 'input window, operand 0, single buffered']
    #allocation3 [shape = 's32[1]{0}', space=sflag, size = 0x4, scoped, tag = 'scoped memory for tpu_custom_call.1']
    #allocation4 [shape = 's32[1]{0}', space=sflag, size = 0x4, scoped, tag = 'scoped memory for tpu_custom_call.1']
    #allocation5 [shape = 'u8[1536]{0}', space=vmem, size = 0x800, scoped, tag = 'input window, operand 1, single buffered']
    #allocation6 [shape = 's32[1]{0}', space=sflag, size = 0x4, scoped, tag = 'scoped memory for tpu_custom_call.1']
    #allocation7 [shape = 'u8[1536]{0}', space=vmem, size = 0x800, scoped, tag = 'output window, operand 0, single buffered']
    %8 = vsyncpa [#allocation3], 0
    %9 = vsyncpa [#allocation6], 0
    %10 = vsyncpa [#allocation4], 0
    // Predicated region
    $region2: #{tpu_custom_call.1} parent=1 // pred_check
      _
    $region3: #{tpu_custom_call.1} parent=1 // pred_check_branch
      %12 = sbr.rel (0) target = $region5
    $region4: #{tpu_custom_call.1} parent=1 // pred_region
      %s14 = ssub.s32 48, 48
      %15 = vsyncadd [#allocation3], %s14
      %s17 = sshll.u32 [#allocation2], 4
      %s18 = int_to_ptr.vmem [resolvable:$true] %s17
      %20 = dma.hbm_to_vmem [thread:$0]  %s0, 48, %s18, [#allocation3]
    $region5: #{tpu_custom_call.1} parent=1 // pred_fallthru
      _
    // Predicated region
    $region6: #{tpu_custom_call.1} parent=1 // pred_check
      _
    $region7: #{tpu_custom_call.1} parent=1 // pred_check_branch
      %22 = sbr.rel (0) target = $region9
    $region8: #{tpu_custom_call.1} parent=1 // pred_region
      %s24 = ssub.s32 48, 48
      %25 = vsyncadd [#allocation6], %s24
      %s27 = sshll.u32 [#allocation5], 4
      %s28 = int_to_ptr.vmem [resolvable:$true] %s27
      %30 = dma.hbm_to_vmem [thread:$0]  %s1, 48, %s28, [#allocation6]
    $region9: #{tpu_custom_call.1} parent=1 // pred_fallthru
      _
    // Predicated region
    $region10: #{tpu_custom_call.1} parent=1 // pred_check
      _
    $region11: #{tpu_custom_call.1} parent=1 // pred_check_branch
      %32 = sbr.rel (0) target = $region13
    $region12: #{tpu_custom_call.1} parent=1 // pred_region
      _
    $region13: #{tpu_custom_call.1} parent=1 // pred_fallthru
      _
    // Predicated region
    $region14: #{tpu_custom_call.1} parent=1 // pred_check
      _
    $region15: #{tpu_custom_call.1} parent=1 // pred_check_branch
      %34 = sbr.rel (0) target = $region17
    $region16: #{tpu_custom_call.1} parent=1 // pred_region
      %35 = dma.done [#allocation3], 48
    $region17: #{tpu_custom_call.1} parent=1 // pred_fallthru
      _
    // Predicated region
    $region18: #{tpu_custom_call.1} parent=1 // pred_check
      _
    $region19: #{tpu_custom_call.1} parent=1 // pred_check_branch
      %37 = sbr.rel (0) target = $region21
    $region20: #{tpu_custom_call.1} parent=1 // pred_region
      %38 = dma.done [#allocation6], 48
    $region21: #{tpu_custom_call.1} parent=1 // pred_fallthru
      _
    %p39 = scmp.eq.s32.totalorder 0, 0
    // Predicated region
    $region22: #{tpu_custom_call.1} parent=1 // pred_check
      %p40 = pneg %p39
    $region23: #{tpu_custom_call.1} parent=1 // pred_check_branch
      %42 = sbr.rel (%p40) target = $region25
    $region24: #{tpu_custom_call.1} parent=1 // pred_region
      %v43 = vlaneseq
      %vm44 = vcmp.ge.s32.totalorder %v43, 0
      %vm45 = vcmp.lt.s32.totalorder %v43, 384
      %vm46 = vmand %vm44, %vm45
      %47 = vst.msk [vmem:[#allocation7] sm:$0x7] %vm46, 0.0
    $region25: #{tpu_custom_call.1} parent=1 // pred_fallthru
      _
    %v48 = vld [vmem:[#allocation2] sm:$0x7]
    %v49 = vld [vmem:[#allocation5] sm:$0x7]
    %v50 = vld [vmem:[%s2] sm:$0x7]
    %v51 = vrcp.pop %v49
    %v52 = vmul.f32 %v50, %v51
    %v53 = vand.u32 2147483647, %v52
    %vm54 = vcmp.lt.f32.partialorder %v53, inf
    %v55 = vsel %vm54, %v52, 0.0
    %v56 = vsub.f32 %v48, %v49
    %v57 = vand.u32 2147483647, %v56
    %v58 = vmul.f32 %v57, %v55
    %v59 = vld [vmem:[#allocation7] sm:$0x7]
    %v60 = vadd.f32 %v59, %v58
    %v61 = vlaneseq
    %vm62 = vcmp.ge.s32.totalorder %v61, 0
    %vm63 = vcmp.lt.s32.totalorder %v61, 384
    %vm64 = vmand %vm62, %vm63
    %65 = vst.msk [vmem:[#allocation7] sm:$0x7] %vm64, %v60
    // Predicated region
    $region26: #{tpu_custom_call.1} parent=1 // pred_check
      _
    $region27: #{tpu_custom_call.1} parent=1 // pred_check_branch
      %67 = sbr.rel (0) target = $region29
    $region28: #{tpu_custom_call.1} parent=1 // pred_region
      %s69 = ssub.s32 48, 48
      %70 = vsyncadd [#allocation4], %s69
      %s72 = sshll.u32 [#allocation7], 4
      %s73 = int_to_ptr.vmem [resolvable:$true] %s72
      %75 = dma.vmem_to_hbm [thread:$0]  %s73, 48, %s3, [#allocation4]
    $region29: #{tpu_custom_call.1} parent=1 // pred_fallthru
      _
    // Predicated region
    $region30: #{tpu_custom_call.1} parent=1 // pred_check
      _
    $region31: #{tpu_custom_call.1} parent=1 // pred_check_branch
      %77 = sbr.rel (0) target = $region33
    $region32: #{tpu_custom_call.1} parent=1 // pred_region
      %78 = dma.done [#allocation4], 48
    $region33: #{tpu_custom_call.1} parent=1 // pred_fallthru
      _
    %79 = vsyncpa [#allocation3], 1
    %80 = vsyncpa [#allocation6], 1
    %81 = vsyncpa [#allocation4], 1

</llo_original>
